<compile_context>
chip_gen: v7x
topology: tpu7x:2x2x1
jax: 0.10.0
libtpu: 0.0.40
codegen_flags: <defaults>
</compile_context>

<pallas_src>
import functools

import jax
import jax.numpy as jnp
from jax.experimental import pallas as pl
from jax.experimental.pallas import tpu as pltpu

LANE = 128  # TPU lane width


# ----------------------------- Pallas kernel --------------------------------
def _regression_train_kernel(x_ref, ts_ref, w1_ref, b1_ref, w2_ref, b2_ref,
                             w3_ref, b3_ref, loss_ref,
                             *, inv_b, n_tasks, tb, batch, steps, need_mask):
    c = pl.program_id(0)      # core-split axis ("parallel")
    i = pl.program_id(1)      # batch-tile reduction axis ("arbitrary")

    # Zero this core's accumulator rows on its first tile.  The output block
    # index is constant over `i`, so it stays VMEM-resident across the
    # reduction and doubles as the accumulator (no scratch needed).
    @pl.when(i == 0)
    def _():
        loss_ref[...] = jnp.zeros_like(loss_ref)

    # FNN forward for this batch tile: bf16 MXU operands, f32 accumulation,
    # bias/ReLU in f32.
    x = x_ref[...].astype(jnp.bfloat16)
    h = jnp.dot(x, w1_ref[...], preferred_element_type=jnp.float32)
    h = jnp.maximum(h + b1_ref[...], 0.0).astype(jnp.bfloat16)

    h = jnp.dot(h, w2_ref[...], preferred_element_type=jnp.float32)
    h = jnp.maximum(h + b2_ref[...], 0.0).astype(jnp.bfloat16)

    ys = jnp.dot(h, w3_ref[...], preferred_element_type=jnp.float32) + b3_ref[...]

    # Per-task error on the real task lanes only (ts streams unpadded).
    diff = ys[:, :n_tasks] - ts_ref[...]

    if need_mask:
        # Last tile may be partial (pl.cdiv grid): zero rows past the batch.
        start = (c * steps + i) * tb
        row = jax.lax.broadcasted_iota(jnp.int32, diff.shape, 0) + start
        diff = jnp.where(row < batch, diff, 0.0)

    # Accumulate this core's sum of squared errors into row 0 of its block.
    loss_ref[0:1, :] += jnp.sum(diff * diff, axis=0, keepdims=True)

    # Finalize: scale the sum by the compile-time constant 1/B.
    @pl.when(i == pl.num_programs(1) - 1)
    def _():
        loss_ref[...] = loss_ref[...] * inv_b


def _pick_batch_tile(batch):
    """Batch tile: big (<=2048), 8-friendly, VMEM-bounded on every TPU gen."""
    if batch <= 2048:
        return batch                      # single full-extent block (always legal)
    for tb in (2048, 1024, 512, 256):
        if batch % tb == 0:
            return tb
    return 1024                           # capped tile; cdiv grid + in-kernel tail mask


# ------------------------- parameter preparation -----------------------------
def prepare_params(params):
    """Hoisted (once per parameter update): pad last layer to a full lane
    width and cast matmul weights to bf16. Biases stay f32."""
    w1, b1, w2, b2, w3, b3 = params
    hidden = w1.shape[1]
    n_tasks = w3.shape[1]
    n_pad = ((n_tasks + LANE - 1) // LANE) * LANE
    w3p = jnp.zeros((hidden, n_pad), jnp.float32).at[:, :n_tasks].set(w3)
    b3p = jnp.zeros((1, n_pad), jnp.float32).at[:, :n_tasks].set(b3)
    return (w1.astype(jnp.bfloat16), b1.astype(jnp.float32),
            w2.astype(jnp.bfloat16), b2.astype(jnp.float32),
            w3p.astype(jnp.bfloat16), b3p.astype(jnp.float32), n_tasks)


# --------------------------------- wrapper -----------------------------------
def regression_train_forward(x, kparams, ts):
    """Fused model-forward + per-task MSE. Returns task_loss of shape [n_tasks]."""
    w1, b1, w2, b2, w3p, b3p, n_tasks = kparams
    batch, d_in = x.shape
    hidden = w1.shape[1]
    n_pad = w3p.shape[1]

    tb = _pick_batch_tile(batch)
    num_tiles = pl.cdiv(batch, tb)
    # Split the batch tiles across two TensorCores when the tile count is even
    # (v7x megacore); a single "parallel" core on v5e/v6e just runs it serially.
    cores = 2 if (num_tiles >= 2 and num_tiles % 2 == 0) else 1
    steps = num_tiles // cores
    need_mask = (batch % tb) != 0
    grid = (cores, steps)

    resident = lambda shape: pl.BlockSpec(shape, lambda c, i: (0, 0))
    stream = lambda shape: pl.BlockSpec(shape, lambda c, i: (c * steps + i, 0))

    flops = 2 * batch * (d_in * hidden + hidden * hidden + hidden * n_pad)
    bytes_accessed = (4 * x.size + 4 * ts.size
                      + 2 * (w1.size + w2.size + w3p.size)
                      + 4 * (b1.size + b2.size + b3p.size)
                      + 4 * cores * 8 * n_tasks)

    kernel = functools.partial(
        _regression_train_kernel,
        inv_b=1.0 / batch, n_tasks=n_tasks, tb=tb, batch=batch,
        steps=steps, need_mask=need_mask)

    out = pl.pallas_call(
        kernel,
        # (8, n_tasks) rows per core keep the output block (8,128)-legal; each
        # core writes its partial mean into row 0 of its own 8-row slab.
        out_shape=jax.ShapeDtypeStruct((cores * 8, n_tasks), jnp.float32),
        grid_spec=pltpu.PrefetchScalarGridSpec(
            num_scalar_prefetch=0,
            grid=grid,
            in_specs=[
                stream((tb, d_in)),            # x  (streamed, f32)
                stream((tb, n_tasks)),         # ts (streamed, UNPADDED, f32)
                resident((d_in, hidden)),      # w1 (VMEM-resident, bf16)
                resident((1, hidden)),         # b1 (f32)
                resident((hidden, hidden)),    # w2 (bf16)
                resident((1, hidden)),         # b2 (f32)
                resident((hidden, n_pad)),     # w3 (padded, bf16)
                resident((1, n_pad)),          # b3 (padded, f32)
            ],
            out_specs=pl.BlockSpec((8, n_tasks), lambda c, i: (c, 0)),
        ),
        compiler_params=pltpu.CompilerParams(
            dimension_semantics=("parallel", "arbitrary"),
        ),
        cost_estimate=pl.CostEstimate(
            flops=flops, transcendentals=0, bytes_accessed=bytes_accessed),
    )(x, ts, w1, b1, w2, b2, w3p, b3p)

    # Rows other than each core's row 0 are zero; summing also merges the
    # two cores' partial means (each already scaled by 1/B).
    return jnp.sum(out, axis=0)  # [n_tasks]


# --------------------------- parameter creation ------------------------------
def xavier_uniform(key, fan_in, fan_out, scale=0.1):
    """torch.nn.init.xavier_uniform_ followed by *= 0.1 (see weights_init)."""
    bound = jnp.sqrt(6.0 / (fan_in + fan_out))
    w = jax.random.uniform(key, (fan_in, fan_out), jnp.float32, -bound, bound)
    return w * scale


def make_params(key, d_in, hidden, n_tasks):
    k1, k2, k3, k4, k5, k6 = jax.random.split(key, 6)
    w1 = xavier_uniform(k1, d_in, hidden)
    w2 = xavier_uniform(k2, hidden, hidden)
    w3 = xavier_uniform(k3, hidden, n_tasks)
    # PyTorch Linear default bias init: U(-1/sqrt(fan_in), 1/sqrt(fan_in)).
    b1 = jax.random.uniform(k4, (1, hidden), jnp.float32,
                            -1.0 / jnp.sqrt(d_in), 1.0 / jnp.sqrt(d_in))
    b2 = jax.random.uniform(k5, (1, hidden), jnp.float32,
                            -1.0 / jnp.sqrt(hidden), 1.0 / jnp.sqrt(hidden))
    b3 = jax.random.uniform(k6, (1, n_tasks), jnp.float32,
                            -1.0 / jnp.sqrt(hidden), 1.0 / jnp.sqrt(hidden))
    return (w1, b1, w2, b2, w3, b3)


# ----------------------------- reference checks -------------------------------
def reference_forward(x, params, ts):
    """Pure-f32 reference (matches the PyTorch module numerics)."""
    w1, b1, w2, b2, w3, b3 = params
    h = jnp.maximum(x @ w1 + b1, 0.0)
    h = jnp.maximum(h @ w2 + b2, 0.0)
    ys = h @ w3 + b3
    return jnp.mean((ys - ts) ** 2, axis=0)


def reference_forward_bf16(x, params, ts):
    """Reference matching the kernel's numerics (bf16 MXU operands, f32 acc)."""
    w1, b1, w2, b2, w3, b3 = params
    bf = jnp.bfloat16
    h = jnp.dot(x.astype(bf), w1.astype(bf), preferred_element_type=jnp.float32)
    h = jnp.maximum(h + b1, 0.0)
    h = jnp.dot(h.astype(bf), w2.astype(bf), preferred_element_type=jnp.float32)
    h = jnp.maximum(h + b2, 0.0)
    ys = jnp.dot(h.astype(bf), w3.astype(bf), preferred_element_type=jnp.float32) + b3
    return jnp.mean((ys - ts) ** 2, axis=0)


if __name__ == "__main__":
    # Small demo shape: batch=128, d_in=32, hidden=128, n_tasks=4.
    B, D_IN, HIDDEN, N_TASKS = 128, 32, 128, 4

    key = jax.random.PRNGKey(0)
    kx, kt, kp = jax.random.split(key, 3)

    x = jax.random.normal(kx, (B, D_IN), jnp.float32)
    ts = jax.random.normal(kt, (B, N_TASKS), jnp.float32)
    params = make_params(kp, D_IN, HIDDEN, N_TASKS)
    kparams = prepare_params(params)   # hoisted: pad w3/b3, cast weights to bf16

    task_loss = jax.block_until_ready(regression_train_forward(x, kparams, ts))
    ref_bf16 = reference_forward_bf16(x, params, ts)
    ref_f32 = reference_forward(x, params, ts)

    assert task_loss.shape == (N_TASKS,)
    # Tight vs a numerics-matched (bf16-operand) reference; loose vs pure f32
    # (bf16 MXU operands are an intentional perf/numerics trade-off).
    assert jnp.allclose(task_loss, ref_bf16, rtol=1e-3, atol=1e-3)
    assert jnp.allclose(task_loss, ref_f32, rtol=2e-2, atol=2e-2)

    # Exercise the remaining code paths: 2-core even tiling (4096),
    # 2-core tiling with a masked partial tail tile (4000),
    # single full-extent non-multiple-of-8 block (100).
    for b2 in (4096, 4000, 100):
        kx2, kt2 = jax.random.split(jax.random.PRNGKey(b2), 2)
        x2 = jax.random.normal(kx2, (b2, D_IN), jnp.float32)
        ts2 = jax.random.normal(kt2, (b2, N_TASKS), jnp.float32)
        out2 = jax.block_until_ready(regression_train_forward(x2, kparams, ts2))
        ref2 = reference_forward_bf16(x2, params, ts2)
        assert jnp.allclose(out2, ref2, rtol=1e-3, atol=1e-3), b2

    print("KERNEL_OK")
</pallas_src>

<mosaic_0001>
module attributes {stable_mosaic.version = 11 : i64} {
  func.func @_regression_train_kernel(%arg0: i32, %arg1: i32, %arg2: memref<128x32xf32, #tpu.memory_space<vmem>>, %arg3: memref<128x4xf32, #tpu.memory_space<vmem>>, %arg4: memref<32x128xbf16, #tpu.memory_space<vmem>>, %arg5: memref<1x128xf32, #tpu.memory_space<vmem>>, %arg6: memref<128x128xbf16, #tpu.memory_space<vmem>>, %arg7: memref<1x128xf32, #tpu.memory_space<vmem>>, %arg8: memref<128x128xbf16, #tpu.memory_space<vmem>>, %arg9: memref<1x128xf32, #tpu.memory_space<vmem>>, %arg10: memref<8x4xf32, #tpu.memory_space<vmem>>) attributes {dimension_semantics = [#tpu.dimension_semantics<parallel>, #tpu.dimension_semantics<arbitrary>], iteration_bounds = array<i64: 1, 1>, scalar_prefetch = 0 : i64, scratch_operands = 0 : i64, tpu.core_type = #tpu.core_type<tc>, window_params = [{transform_indices = @transform_0, window_bounds = array<i64: 128, 32>}, {transform_indices = @transform_1, window_bounds = array<i64: 128, 4>}, {pipeline_mode = #tpu.pipeline_mode<synchronous>, transform_indices = @transform_2, window_bounds = array<i64: 32, 128>}, {pipeline_mode = #tpu.pipeline_mode<synchronous>, transform_indices = @transform_3, window_bounds = array<i64: 1, 128>}, {pipeline_mode = #tpu.pipeline_mode<synchronous>, transform_indices = @transform_4, window_bounds = array<i64: 128, 128>}, {pipeline_mode = #tpu.pipeline_mode<synchronous>, transform_indices = @transform_5, window_bounds = array<i64: 1, 128>}, {pipeline_mode = #tpu.pipeline_mode<synchronous>, transform_indices = @transform_6, window_bounds = array<i64: 128, 128>}, {pipeline_mode = #tpu.pipeline_mode<synchronous>, transform_indices = @transform_7, window_bounds = array<i64: 1, 128>}, {transform_indices = @transform_8, window_bounds = array<i64: 8, 4>}]} {
    %c0_i32 = arith.constant 0 : i32
    %0 = arith.cmpi eq, %arg1, %c0_i32 : i32
    %1 = arith.extui %0 : i1 to i32
    %c0_i32_0 = arith.constant 0 : i32
    %2 = arith.cmpi ne, %1, %c0_i32_0 : i32
    scf.if %2 {
      %cst_27 = arith.constant 0.000000e+00 : f32
      %38 = vector.broadcast %cst_27 : f32 to vector<8x4xf32>
      %c0_28 = arith.constant 0 : index
      %c0_29 = arith.constant 0 : index
      %39 = vector.load %arg10[%c0_28, %c0_29] : memref<8x4xf32, #tpu.memory_space<vmem>>, vector<8x4xf32>
      tpu.vector_store %arg10[%c0_28, %c0_29], %38 {strides = array<i32>} : memref<8x4xf32, #tpu.memory_space<vmem>>, vector<8x4xf32>,
    } else {
    }
    %c0 = arith.constant 0 : index
    %c0_1 = arith.constant 0 : index
    %3 = vector.load %arg2[%c0, %c0_1] : memref<128x32xf32, #tpu.memory_space<vmem>>, vector<128x32xf32>
    %4 = arith.truncf %3 : vector<128x32xf32> to vector<128x32xbf16>
    %c0_2 = arith.constant 0 : index
    %c0_3 = arith.constant 0 : index
    %5 = vector.load %arg4[%c0_2, %c0_3] : memref<32x128xbf16, #tpu.memory_space<vmem>>, vector<32x128xbf16>
    %cst = arith.constant dense<0.000000e+00> : vector<128x128xf32>
    %6 = tpu.matmul %4, %5, %cst {dimension_numbers = #tpu.dot_dimension_numbers<[1], [0], [0], [1], [0, 0, 1, 1], [], []>} : vector<128x32xbf16>, vector<32x128xbf16>, vector<128x128xf32> -> vector<128x128xf32>
    %c0_4 = arith.constant 0 : index
    %c0_5 = arith.constant 0 : index
    %7 = vector.load %arg5[%c0_4, %c0_5] : memref<1x128xf32, #tpu.memory_space<vmem>>, vector<1x128xf32>
    %8 = vector.broadcast %7 : vector<1x128xf32> to vector<128x128xf32>
    %9 = arith.addf %6, %8 : vector<128x128xf32>
    %cst_6 = arith.constant 0.000000e+00 : f32
    %10 = vector.broadcast %cst_6 : f32 to vector<128x128xf32>
    %11 = arith.maximumf %9, %10 : vector<128x128xf32>
    %12 = arith.truncf %11 : vector<128x128xf32> to vector<128x128xbf16>
    %c0_7 = arith.constant 0 : index
    %c0_8 = arith.constant 0 : index
    %13 = vector.load %arg6[%c0_7, %c0_8] : memref<128x128xbf16, #tpu.memory_space<vmem>>, vector<128x128xbf16>
    %cst_9 = arith.constant dense<0.000000e+00> : vector<128x128xf32>
    %14 = tpu.matmul %12, %13, %cst_9 {dimension_numbers = #tpu.dot_dimension_numbers<[1], [0], [0], [1], [0, 0, 1, 1], [], []>} : vector<128x128xbf16>, vector<128x128xbf16>, vector<128x128xf32> -> vector<128x128xf32>
    %c0_10 = arith.constant 0 : index
    %c0_11 = arith.constant 0 : index
    %15 = vector.load %arg7[%c0_10, %c0_11] : memref<1x128xf32, #tpu.memory_space<vmem>>, vector<1x128xf32>
    %16 = vector.broadcast %15 : vector<1x128xf32> to vector<128x128xf32>
    %17 = arith.addf %14, %16 : vector<128x128xf32>
    %cst_12 = arith.constant 0.000000e+00 : f32
    %18 = vector.broadcast %cst_12 : f32 to vector<128x128xf32>
    %19 = arith.maximumf %17, %18 : vector<128x128xf32>
    %20 = arith.truncf %19 : vector<128x128xf32> to vector<128x128xbf16>
    %c0_13 = arith.constant 0 : index
    %c0_14 = arith.constant 0 : index
    %21 = vector.load %arg8[%c0_13, %c0_14] : memref<128x128xbf16, #tpu.memory_space<vmem>>, vector<128x128xbf16>
    %cst_15 = arith.constant dense<0.000000e+00> : vector<128x128xf32>
    %22 = tpu.matmul %20, %21, %cst_15 {dimension_numbers = #tpu.dot_dimension_numbers<[1], [0], [0], [1], [0, 0, 1, 1], [], []>} : vector<128x128xbf16>, vector<128x128xbf16>, vector<128x128xf32> -> vector<128x128xf32>
    %c0_16 = arith.constant 0 : index
    %c0_17 = arith.constant 0 : index
    %23 = vector.load %arg9[%c0_16, %c0_17] : memref<1x128xf32, #tpu.memory_space<vmem>>, vector<1x128xf32>
    %24 = vector.broadcast %23 : vector<1x128xf32> to vector<128x128xf32>
    %25 = arith.addf %22, %24 : vector<128x128xf32>
    %26 = vector.extract_strided_slice %25 {offsets = [0, 0], sizes = [128, 4], strides = [1, 1]} : vector<128x128xf32> to vector<128x4xf32>
    %c0_18 = arith.constant 0 : index
    %c0_19 = arith.constant 0 : index
    %27 = vector.load %arg3[%c0_18, %c0_19] : memref<128x4xf32, #tpu.memory_space<vmem>>, vector<128x4xf32>
    %28 = arith.subf %26, %27 : vector<128x4xf32>
    %c0_20 = arith.constant 0 : index
    %c0_21 = arith.constant 0 : index
    %29 = vector.load %arg10[%c0_20, %c0_21] : memref<8x4xf32, #tpu.memory_space<vmem>>, vector<1x4xf32>
    %30 = arith.mulf %28, %28 : vector<128x4xf32>
    %cst_22 = arith.constant dense<0.000000e+00> : vector<4xf32>
    %31 = vector.multi_reduction <add>, %30, %cst_22 [0] : vector<128x4xf32> to vector<4xf32>
    %32 = vector.shape_cast %31 : vector<4xf32> to vector<1x4xf32>
    %33 = arith.addf %29, %32 : vector<1x4xf32>
    %c0_23 = arith.constant 0 : index
    %c0_24 = arith.constant 0 : index
    %34 = vector.load %arg10[%c0_23, %c0_24] : memref<8x4xf32, #tpu.memory_space<vmem>>, vector<1x4xf32>
    tpu.vector_store %arg10[%c0_23, %c0_24], %33 {strides = array<i32>} : memref<8x4xf32, #tpu.memory_space<vmem>>, vector<1x4xf32>,
    %c0_i32_25 = arith.constant 0 : i32
    %35 = arith.cmpi eq, %arg1, %c0_i32_25 : i32
    %36 = arith.extui %35 : i1 to i32
    %c0_i32_26 = arith.constant 0 : i32
    %37 = arith.cmpi ne, %36, %c0_i32_26 : i32
    scf.if %37 {
      %c0_27 = arith.constant 0 : index
      %c0_28 = arith.constant 0 : index
      %38 = vector.load %arg10[%c0_27, %c0_28] : memref<8x4xf32, #tpu.memory_space<vmem>>, vector<8x4xf32>
      %cst_29 = arith.constant 7.812500e-03 : f32
      %39 = vector.broadcast %cst_29 : f32 to vector<8x4xf32>
      %40 = arith.mulf %38, %39 : vector<8x4xf32>
      %c0_30 = arith.constant 0 : index
      %c0_31 = arith.constant 0 : index
      %41 = vector.load %arg10[%c0_30, %c0_31] : memref<8x4xf32, #tpu.memory_space<vmem>>, vector<8x4xf32>
      tpu.vector_store %arg10[%c0_30, %c0_31], %40 {strides = array<i32>} : memref<8x4xf32, #tpu.memory_space<vmem>>, vector<8x4xf32>,
    } else {
    }
    return
  }
  func.func @transform_0(%arg0: i32, %arg1: i32) -> (i32, i32) {
    %c1_i32 = arith.constant 1 : i32
    %0 = arith.muli %arg0, %c1_i32 : i32
    %1 = arith.addi %0, %arg1 : i32
    %c0_i32 = arith.constant 0 : i32
    %c0_i32_0 = arith.constant 0 : i32
    return %1, %c0_i32 : i32, i32
  }
  func.func @transform_1(%arg0: i32, %arg1: i32) -> (i32, i32) {
    %c1_i32 = arith.constant 1 : i32
    %0 = arith.muli %arg0, %c1_i32 : i32
    %1 = arith.addi %0, %arg1 : i32
    %c0_i32 = arith.constant 0 : i32
    %c0_i32_0 = arith.constant 0 : i32
    return %1, %c0_i32 : i32, i32
  }
  func.func @transform_2(%arg0: i32, %arg1: i32) -> (i32, i32) {
    %c0_i32 = arith.constant 0 : i32
    %c0_i32_0 = arith.constant 0 : i32
    %c0_i32_1 = arith.constant 0 : i32
    return %c0_i32, %c0_i32_0 : i32, i32
  }
  func.func @transform_3(%arg0: i32, %arg1: i32) -> (i32, i32) {
    %c0_i32 = arith.constant 0 : i32
    %c0_i32_0 = arith.constant 0 : i32
    %c0_i32_1 = arith.constant 0 : i32
    return %c0_i32, %c0_i32_0 : i32, i32
  }
  func.func @transform_4(%arg0: i32, %arg1: i32) -> (i32, i32) {
    %c0_i32 = arith.constant 0 : i32
    %c0_i32_0 = arith.constant 0 : i32
    %c0_i32_1 = arith.constant 0 : i32
    return %c0_i32, %c0_i32_0 : i32, i32
  }
  func.func @transform_5(%arg0: i32, %arg1: i32) -> (i32, i32) {
    %c0_i32 = arith.constant 0 : i32
    %c0_i32_0 = arith.constant 0 : i32
    %c0_i32_1 = arith.constant 0 : i32
    return %c0_i32, %c0_i32_0 : i32, i32
  }
  func.func @transform_6(%arg0: i32, %arg1: i32) -> (i32, i32) {
    %c0_i32 = arith.constant 0 : i32
    %c0_i32_0 = arith.constant 0 : i32
    %c0_i32_1 = arith.constant 0 : i32
    return %c0_i32, %c0_i32_0 : i32, i32
  }
  func.func @transform_7(%arg0: i32, %arg1: i32) -> (i32, i32) {
    %c0_i32 = arith.constant 0 : i32
    %c0_i32_0 = arith.constant 0 : i32
    %c0_i32_1 = arith.constant 0 : i32
    return %c0_i32, %c0_i32_0 : i32, i32
  }
  func.func @transform_8(%arg0: i32, %arg1: i32) -> (i32, i32) {
    %c0_i32 = arith.constant 0 : i32
    %c0_i32_0 = arith.constant 0 : i32
    return %arg0, %c0_i32 : i32, i32
  }
}

</mosaic_0001>

<llo_original>
// kernel: tpu_custom_call.1
$region0: #{tpu_custom_call.1}
  #allocation0 [shape = 'u32[]', space=smem, size = 0x4, offset = 0x4, fixed_abs, tag = 'smem constant byte address 0x4 - core index']
  #allocation1 [shape = 'u32[144,128]{1,0:T(1,128)}', space=vmem, size = 0x12000, scoped, tag = 'internal scratch']
  %s0 = inlined_call_operand.vmem [shape: f32[128,32], index: 0, kind: input, shape index: {}]
  %s1 = inlined_call_operand.vmem [shape: f32[128,4], index: 1, kind: input, shape index: {}]
  %s2 = inlined_call_operand.vmem [shape: bf16[32,128], index: 2, kind: input, shape index: {}]
  %s3 = inlined_call_operand.vmem [shape: f32[1,128], index: 3, kind: input, shape index: {}]
  %s4 = inlined_call_operand.vmem [shape: bf16[128,128], index: 4, kind: input, shape index: {}]
  %s5 = inlined_call_operand.vmem [shape: f32[1,128], index: 5, kind: input, shape index: {}]
  %s6 = inlined_call_operand.vmem [shape: bf16[128,128], index: 6, kind: input, shape index: {}]
  %s7 = inlined_call_operand.vmem [shape: f32[1,128], index: 7, kind: input, shape index: {}]
  %s8 = inlined_call_operand.vmem [shape: f32[8,4], index: 8, kind: output, shape index: {}]
  %s9 = sld [smem:[#allocation0]]
  $region50: #{tpu_custom_call.1} parent=0
    _
  %s11 = ssub.s32 1, %s9
  %s12 = scalar_select 0, %s11, %s9
  // Predicated region
  $region2: #{tpu_custom_call.1} parent=0 // pred_check
    _
  $region3: #{tpu_custom_call.1} parent=0 // pred_check_branch
    %14 = sbr.rel (0) target = $region5
  $region4: #{tpu_custom_call.1} parent=0 // pred_region
    %s15 = sadd.s32 0, 0
    %s16 = smul.u32 16, %s15
    %p17 = scmp.lt.s32.totalorder %s16, 15
    %s18 = scalar_select %p17, %s16, 15
    %s19 = smul.addr %s18, 8
    %s20 = scalar_lea.vmem %s0, %s19
    %s21 = sadd.s32 0, 0
    %s22 = smul.u32 16, %s21
  $region5: #{tpu_custom_call.1} parent=0 // pred_fallthru
    _
  // Predicated region
  $region6: #{tpu_custom_call.1} parent=0 // pred_check
    _
  $region7: #{tpu_custom_call.1} parent=0 // pred_check_branch
    %24 = sbr.rel (0) target = $region9
  $region8: #{tpu_custom_call.1} parent=0 // pred_region
    %s25 = sadd.s32 0, 0
    %s26 = smul.u32 16, %s25
    %p27 = scmp.lt.s32.totalorder %s26, 15
    %s28 = scalar_select %p27, %s26, 15
    %s29 = smul.addr %s28, 8
    %s30 = scalar_lea.vmem %s1, %s29
    %s31 = sadd.s32 0, 0
    %s32 = smul.u32 16, %s31
  $region9: #{tpu_custom_call.1} parent=0 // pred_fallthru
    _
  // Predicated region
  $region10: #{tpu_custom_call.1} parent=0 // pred_check
    _
  $region11: #{tpu_custom_call.1} parent=0 // pred_check_branch
    %34 = sbr.rel (0) target = $region13
  $region12: #{tpu_custom_call.1} parent=0 // pred_region
    _
  $region13: #{tpu_custom_call.1} parent=0 // pred_fallthru
    _
  // Predicated region
  $region14: #{tpu_custom_call.1} parent=0 // pred_check
    _
  $region15: #{tpu_custom_call.1} parent=0 // pred_check_branch
    %36 = sbr.rel (0) target = $region17
  $region16: #{tpu_custom_call.1} parent=0 // pred_region
    _
  $region17: #{tpu_custom_call.1} parent=0 // pred_fallthru
    _
  // Predicated region
  $region18: #{tpu_custom_call.1} parent=0 // pred_check
    _
  $region19: #{tpu_custom_call.1} parent=0 // pred_check_branch
    %38 = sbr.rel (0) target = $region21
  $region20: #{tpu_custom_call.1} parent=0 // pred_region
    _
  $region21: #{tpu_custom_call.1} parent=0 // pred_fallthru
    _
  // Predicated region
  $region22: #{tpu_custom_call.1} parent=0 // pred_check
    _
  $region23: #{tpu_custom_call.1} parent=0 // pred_check_branch
    %40 = sbr.rel (0) target = $region25
  $region24: #{tpu_custom_call.1} parent=0 // pred_region
    _
  $region25: #{tpu_custom_call.1} parent=0 // pred_fallthru
    _
  // Predicated region
  $region26: #{tpu_custom_call.1} parent=0 // pred_check
    _
  $region27: #{tpu_custom_call.1} parent=0 // pred_check_branch
    %42 = sbr.rel (0) target = $region29
  $region28: #{tpu_custom_call.1} parent=0 // pred_region
    _
  $region29: #{tpu_custom_call.1} parent=0 // pred_fallthru
    _
  // Predicated region
  $region30: #{tpu_custom_call.1} parent=0 // pred_check
    _
  $region31: #{tpu_custom_call.1} parent=0 // pred_check_branch
    %44 = sbr.rel (0) target = $region33
  $region32: #{tpu_custom_call.1} parent=0 // pred_region
    _
  $region33: #{tpu_custom_call.1} parent=0 // pred_fallthru
    _
  %s45 = sadd.s32 0, 0
  %s46 = smul.u32 16, %s45
  %p47 = scmp.lt.s32.totalorder %s46, 15
  %s48 = scalar_select %p47, %s46, 15
  %s49 = smul.addr %s48, 8
  %s50 = scalar_lea.vmem %s0, %s49
  %s51 = sadd.s32 0, 0
  %s52 = smul.u32 16, %s51
  %p53 = scmp.lt.s32.totalorder %s52, 15
  %s54 = scalar_select %p53, %s52, 15
  %s55 = smul.addr %s54, 8
  %s56 = scalar_lea.vmem %s1, %s55
  %s57 = sadd.s32 0, 0
  %s58 = smul.u32 16, %s57
  %p59 = scmp.lt.s32.totalorder %s58, 15
  %s60 = scalar_select %p59, %s58, 15
  %s61 = smul.addr %s60, 8
  %s62 = scalar_lea.vmem %s0, %s61
  %s63 = sadd.s32 0, 0
  %s64 = smul.u32 16, %s63
  %s65 = sadd.s32 0, 0
  %s66 = smul.u32 16, %s65
  %p67 = scmp.lt.s32.totalorder %s66, 15
  %s68 = scalar_select %p67, %s66, 15
  %s69 = smul.addr %s68, 8
  %s70 = scalar_lea.vmem %s1, %s69
  %s71 = sadd.s32 0, 0
  %s72 = smul.u32 16, %s71
  %p74 = scmp.eq.s32.totalorder 0, 0
  // Predicated region
  $region34: #{tpu_custom_call.1} parent=0 // pred_check
    %p75 = pneg %p74
  $region35: #{tpu_custom_call.1} parent=0 // pred_check_branch
    %77 = sbr.rel (%p75) target = $region37
  $region36: #{tpu_custom_call.1} parent=0 // pred_region
    %vm78 = vcmask 31744
    %79 = vst.msk [vmem:[%s8] sm:$0xff] %vm78, 0.0
  $region37: #{tpu_custom_call.1} parent=0 // pred_fallthru
    _
  %v80 = vld [vmem:[%s62] sm:$0xff]
  %v81 = vld [vmem:[%s62 + $0x8] sm:$0xff]
  %v82 = vld [vmem:[%s62 + $0x10] sm:$0xff]
  %v83 = vld [vmem:[%s62 + $0x18] sm:$0xff]
  %v84 = vld [vmem:[%s62 + $0x20] sm:$0xff]
  %v85 = vld [vmem:[%s62 + $0x28] sm:$0xff]
  %v86 = vld [vmem:[%s62 + $0x30] sm:$0xff]
  %v87 = vld [vmem:[%s62 + $0x38] sm:$0xff]
  %v88 = vld [vmem:[%s62 + $0x40] sm:$0xff]
  %v89 = vld [vmem:[%s62 + $0x48] sm:$0xff]
  %v90 = vld [vmem:[%s62 + $0x50] sm:$0xff]
  %v91 = vld [vmem:[%s62 + $0x58] sm:$0xff]
  %v92 = vld [vmem:[%s62 + $0x60] sm:$0xff]
  %v93 = vld [vmem:[%s62 + $0x68] sm:$0xff]
  %v94 = vld [vmem:[%s62 + $0x70] sm:$0xff]
  %v95 = vld [vmem:[%s62 + $0x78] sm:$0xff]
  %v96 = vpack.c.bf16 %v81, %v80
  %v97 = vpack.c.bf16 %v83, %v82
  %v98 = vpack.c.bf16 %v85, %v84
  %v99 = vpack.c.bf16 %v87, %v86
  %v100 = vpack.c.bf16 %v89, %v88
  %v101 = vpack.c.bf16 %v91, %v90
  %v102 = vpack.c.bf16 %v93, %v92
  %v103 = vpack.c.bf16 %v95, %v94
  %v104 = vld [vmem:[%s2] sm:$0xf]
  %v105 = vld [vmem:[%s2 + $0x4] sm:$0xf]
  %v106 = vld [vmem:[%s2 + $0x8] sm:$0xf]
  %v107 = vld [vmem:[%s2 + $0xc] sm:$0xf]
  %v108 = vld [vmem:[%s3] sm:$0x1]
  %v110 = vlaneseq
  %v111 = vshrl.u32 %v110, 7
  %v112 = vsub.s32 0, %v111
  %v113 = vrot.slane %v108, %v112
  %v119 = vunpack.c.l.b16 %v104
  %v120 = vunpack.c.l.b16 %v105
  %v121 = vunpack.c.l.b16 %v106
  %v122 = vunpack.c.l.b16 %v107
  %v123 = vpack.c.b16 %v120, %v119
  %v124 = vpack.c.b16 %v122, %v121
  %vm127 = vcmask 261120
  %v129 = vsel %vm127, %v96, 0
  %v132 = vsel %vm127, %v97, 0
  %v135 = vsel %vm127, %v98, 0
  %v138 = vsel %vm127, %v99, 0
  %v141 = vsel %vm127, %v100, 0
  %v144 = vsel %vm127, %v101, 0
  %v147 = vsel %vm127, %v102, 0
  %v150 = vsel %vm127, %v103, 0
  %152 = vmatprep.subr.bf16.mxu0 0
  %153 = vmatpush1.bf16.msra.mxu0 %v123
  %154 = vmatprep.subr.bf16.mxu0 0
  %155 = vmatpush1.bf16.msra.mxu0 %v124
  %156 = vmatprep.subr.bf16.mxu0 0
  %157 = vmatpush1.bf16.msra.mxu0 0
  %158 = vmatprep.subr.bf16.mxu0 0
  %159 = vmatpush1.bf16.msra.mxu0 0
  %160 = vmatprep.subr.bf16.mxu0 0
  %161 = vmatpush1.bf16.msra.mxu0 0
  %162 = vmatprep.subr.bf16.mxu0 0
  %163 = vmatpush1.bf16.msra.mxu0 0
  %164 = vmatprep.subr.bf16.mxu0 0
  %165 = vmatpush1.bf16.msra.mxu0 0
  %166 = vmatprep.subr.bf16.mxu0 0
  %167 = vmatpush1.bf16.msra.mxu0 0
  %168 = vmatprep.subr.bf16.mxu0 0
  %169 = vmatpush1.bf16.msra.mxu0 0
  %170 = vmatprep.subr.bf16.mxu0 0
  %171 = vmatpush1.bf16.msra.mxu0 0
  %172 = vmatprep.subr.bf16.mxu0 0
  %173 = vmatpush1.bf16.msra.mxu0 0
  %174 = vmatprep.subr.bf16.mxu0 0
  %175 = vmatpush1.bf16.msra.mxu0 0
  %176 = vmatprep.subr.bf16.mxu0 0
  %177 = vmatpush1.bf16.msra.mxu0 0
  %178 = vmatprep.subr.bf16.mxu0 0
  %179 = vmatpush1.bf16.msra.mxu0 0
  %180 = vmatprep.subr.bf16.mxu0 0
  %181 = vmatpush1.bf16.msra.mxu0 0
  %182 = vmatprep.subr.bf16.mxu0 0
  %183 = vmatpush1.bf16.msra.mxu0 0
  %184 = vmatprep.mubr.bf16.mxu0 0
  %185 = vmatmul.mubr.bf16.gmra.mrb[0].mxu0 %v129
  %v186 = vpop.f32.mrb[0].mxu0
  %v187 = vadd.f32 %v113, %v186
  %v188 = vpop.f32.mrb[0].mxu0
  %v189 = vpop.f32.mrb[0].mxu0
  %v190 = vadd.f32 %v113, %v189
  %v191 = vpop.f32.mrb[0].mxu0
  %192 = vmatprep.mubr.bf16.mxu0 0
  %193 = vmatmul.mubr.bf16.gmra.mrb[0].mxu0 %v132
  %v194 = vpop.f32.mrb[0].mxu0
  %v195 = vadd.f32 %v113, %v194
  %v196 = vpop.f32.mrb[0].mxu0
  %v197 = vpop.f32.mrb[0].mxu0
  %v198 = vadd.f32 %v113, %v197
  %v199 = vpop.f32.mrb[0].mxu0
  %200 = vmatprep.mubr.bf16.mxu0 0
  %201 = vmatmul.mubr.bf16.gmra.mrb[0].mxu0 %v135
  %v202 = vpop.f32.mrb[0].mxu0
  %v203 = vadd.f32 %v113, %v202
  %v204 = vpop.f32.mrb[0].mxu0
  %v205 = vpop.f32.mrb[0].mxu0
  %v206 = vadd.f32 %v113, %v205
  %v207 = vpop.f32.mrb[0].mxu0
  %208 = vmatprep.mubr.bf16.mxu0 0
  %209 = vmatmul.mubr.bf16.gmra.mrb[0].mxu0 %v138
  %v210 = vpop.f32.mrb[0].mxu0
  %v211 = vadd.f32 %v113, %v210
  %v212 = vpop.f32.mrb[0].mxu0
  %v213 = vpop.f32.mrb[0].mxu0
  %v214 = vadd.f32 %v113, %v213
  %v215 = vpop.f32.mrb[0].mxu0
  %216 = vmatprep.mubr.bf16.mxu0 0
  %217 = vmatmul.mubr.bf16.gmra.mrb[0].mxu0 %v141
  %v218 = vpop.f32.mrb[0].mxu0
  %v219 = vadd.f32 %v113, %v218
  %v220 = vpop.f32.mrb[0].mxu0
  %v221 = vpop.f32.mrb[0].mxu0
  %v222 = vadd.f32 %v113, %v221
  %v223 = vpop.f32.mrb[0].mxu0
  %224 = vmatprep.mubr.bf16.mxu0 0
  %225 = vmatmul.mubr.bf16.gmra.mrb[0].mxu0 %v144
  %v226 = vpop.f32.mrb[0].mxu0
  %v227 = vadd.f32 %v113, %v226
  %v228 = vpop.f32.mrb[0].mxu0
  %v229 = vpop.f32.mrb[0].mxu0
  %v230 = vadd.f32 %v113, %v229
  %v231 = vpop.f32.mrb[0].mxu0
  %232 = vmatprep.mubr.bf16.mxu0 0
  %233 = vmatmul.mubr.bf16.gmra.mrb[0].mxu0 %v147
  %v234 = vpop.f32.mrb[0].mxu0
  %v235 = vadd.f32 %v113, %v234
  %v236 = vpop.f32.mrb[0].mxu0
  %v237 = vpop.f32.mrb[0].mxu0
  %v238 = vadd.f32 %v113, %v237
  %v239 = vpop.f32.mrb[0].mxu0
  %240 = vmatprep.mubr.bf16.mxu0 0
  %241 = vmatmul.mubr.bf16.gmra.mrb[0].mxu0 %v150
  %v242 = vpop.f32.mrb[0].mxu0
  %v243 = vadd.f32 %v113, %v242
  %v244 = vpop.f32.mrb[0].mxu0
  %v245 = vpop.f32.mrb[0].mxu0
  %v246 = vadd.f32 %v113, %v245
  %v247 = vpop.f32.mrb[0].mxu0
  %248 = vdwg.mxu0
  %v249 = vmax.f32 %v187, 0.0
  %v250 = vmax.f32 %v190, 0.0
  %v251 = vmax.f32 %v195, 0.0
  %v252 = vmax.f32 %v198, 0.0
  %v253 = vmax.f32 %v203, 0.0
  %v254 = vmax.f32 %v206, 0.0
  %v255 = vmax.f32 %v211, 0.0
  %v256 = vmax.f32 %v214, 0.0
  %v257 = vmax.f32 %v219, 0.0
  %v258 = vmax.f32 %v222, 0.0
  %v259 = vmax.f32 %v227, 0.0
  %v260 = vmax.f32 %v230, 0.0
  %v261 = vmax.f32 %v235, 0.0
  %v262 = vmax.f32 %v238, 0.0
  %v263 = vmax.f32 %v243, 0.0
  %v264 = vmax.f32 %v246, 0.0
  %v265 = vpack.c.bf16 %v250, %v249
  %v266 = vpack.c.bf16 %v252, %v251
  %v267 = vpack.c.bf16 %v254, %v253
  %v268 = vpack.c.bf16 %v256, %v255
  %v269 = vpack.c.bf16 %v258, %v257
  %v270 = vpack.c.bf16 %v260, %v259
  %v271 = vpack.c.bf16 %v262, %v261
  %v272 = vpack.c.bf16 %v264, %v263
  %v273 = vld [vmem:[%s4] sm:$0xf]
  %v274 = vld [vmem:[%s4 + $0x4] sm:$0xf]
  %v275 = vld [vmem:[%s4 + $0x8] sm:$0xf]
  %v276 = vld [vmem:[%s4 + $0xc] sm:$0xf]
  %v277 = vld [vmem:[%s4 + $0x10] sm:$0xf]
  %v278 = vld [vmem:[%s4 + $0x14] sm:$0xf]
  %v279 = vld [vmem:[%s4 + $0x18] sm:$0xf]
  %v280 = vld [vmem:[%s4 + $0x1c] sm:$0xf]
  %v281 = vld [vmem:[%s4 + $0x20] sm:$0xf]
  %v282 = vld [vmem:[%s4 + $0x24] sm:$0xf]
  %v283 = vld [vmem:[%s4 + $0x28] sm:$0xf]
  %v284 = vld [vmem:[%s4 + $0x2c] sm:$0xf]
  %v285 = vld [vmem:[%s4 + $0x30] sm:$0xf]
  %v286 = vld [vmem:[%s4 + $0x34] sm:$0xf]
  %v287 = vld [vmem:[%s4 + $0x38] sm:$0xf]
  %v288 = vld [vmem:[%s4 + $0x3c] sm:$0xf]
  %v289 = vld [vmem:[%s5] sm:$0x1]
  %v291 = vlaneseq
  %v292 = vshrl.u32 %v291, 7
  %v293 = vsub.s32 0, %v292
  %v294 = vrot.slane %v289, %v293
  %v312 = vunpack.c.l.b16 %v273
  %v313 = vunpack.c.l.b16 %v274
  %v314 = vunpack.c.l.b16 %v275
  %v315 = vunpack.c.l.b16 %v276
  %v316 = vunpack.c.l.b16 %v277
  %v317 = vunpack.c.l.b16 %v278
  %v318 = vunpack.c.l.b16 %v279
  %v319 = vunpack.c.l.b16 %v280
  %v320 = vunpack.c.l.b16 %v281
  %v321 = vunpack.c.l.b16 %v282
  %v322 = vunpack.c.l.b16 %v283
  %v323 = vunpack.c.l.b16 %v284
  %v324 = vunpack.c.l.b16 %v285
  %v325 = vunpack.c.l.b16 %v286
  %v326 = vunpack.c.l.b16 %v287
  %v327 = vunpack.c.l.b16 %v288
  %v328 = vpack.c.b16 %v313, %v312
  %v329 = vpack.c.b16 %v315, %v314
  %v330 = vpack.c.b16 %v317, %v316
  %v331 = vpack.c.b16 %v319, %v318
  %v332 = vpack.c.b16 %v321, %v320
  %v333 = vpack.c.b16 %v323, %v322
  %v334 = vpack.c.b16 %v325, %v324
  %v335 = vpack.c.b16 %v327, %v326
  %344 = vmatprep.subr.bf16.mxu0 0
  %345 = vmatpush1.bf16.msra.mxu0 %v328
  %346 = vmatprep.subr.bf16.mxu0 0
  %347 = vmatpush1.bf16.msra.mxu0 %v329
  %348 = vmatprep.subr.bf16.mxu0 0
  %349 = vmatpush1.bf16.msra.mxu0 %v330
  %350 = vmatprep.subr.bf16.mxu0 0
  %351 = vmatpush1.bf16.msra.mxu0 %v331
  %352 = vmatprep.subr.bf16.mxu0 0
  %353 = vmatpush1.bf16.msra.mxu0 %v332
  %354 = vmatprep.subr.bf16.mxu0 0
  %355 = vmatpush1.bf16.msra.mxu0 %v333
  %356 = vmatprep.subr.bf16.mxu0 0
  %357 = vmatpush1.bf16.msra.mxu0 %v334
  %358 = vmatprep.subr.bf16.mxu0 0
  %359 = vmatpush1.bf16.msra.mxu0 %v335
  %360 = vmatprep.subr.bf16.mxu0 0
  %361 = vmatpush1.bf16.msra.mxu0 0
  %362 = vmatprep.subr.bf16.mxu0 0
  %363 = vmatpush1.bf16.msra.mxu0 0
  %364 = vmatprep.subr.bf16.mxu0 0
  %365 = vmatpush1.bf16.msra.mxu0 0
  %366 = vmatprep.subr.bf16.mxu0 0
  %367 = vmatpush1.bf16.msra.mxu0 0
  %368 = vmatprep.subr.bf16.mxu0 0
  %369 = vmatpush1.bf16.msra.mxu0 0
  %370 = vmatprep.subr.bf16.mxu0 0
  %371 = vmatpush1.bf16.msra.mxu0 0
  %372 = vmatprep.subr.bf16.mxu0 0
  %373 = vmatpush1.bf16.msra.mxu0 0
  %374 = vmatprep.subr.bf16.mxu0 0
  %375 = vmatpush1.bf16.msra.mxu0 0
  %376 = vmatprep.mubr.bf16.mxu0 0
  %377 = vmatmul.mubr.bf16.gmra.mrb[0].mxu0 %v265
  %v378 = vpop.f32.mrb[0].mxu0
  %v379 = vadd.f32 %v294, %v378
  %v380 = vpop.f32.mrb[0].mxu0
  %v381 = vpop.f32.mrb[0].mxu0
  %v382 = vadd.f32 %v294, %v381
  %v383 = vpop.f32.mrb[0].mxu0
  %384 = vmatprep.mubr.bf16.mxu0 0
  %385 = vmatmul.mubr.bf16.gmra.mrb[0].mxu0 %v266
  %v386 = vpop.f32.mrb[0].mxu0
  %v387 = vadd.f32 %v294, %v386
  %v388 = vpop.f32.mrb[0].mxu0
  %v389 = vpop.f32.mrb[0].mxu0
  %v390 = vadd.f32 %v294, %v389
  %v391 = vpop.f32.mrb[0].mxu0
  %392 = vmatprep.mubr.bf16.mxu0 0
  %393 = vmatmul.mubr.bf16.gmra.mrb[0].mxu0 %v267
  %v394 = vpop.f32.mrb[0].mxu0
  %v395 = vadd.f32 %v294, %v394
  %v396 = vpop.f32.mrb[0].mxu0
  %v397 = vpop.f32.mrb[0].mxu0
  %v398 = vadd.f32 %v294, %v397
  %v399 = vpop.f32.mrb[0].mxu0
  %400 = vmatprep.mubr.bf16.mxu0 0
  %401 = vmatmul.mubr.bf16.gmra.mrb[0].mxu0 %v268
  %v402 = vpop.f32.mrb[0].mxu0
  %v403 = vadd.f32 %v294, %v402
  %v404 = vpop.f32.mrb[0].mxu0
  %v405 = vpop.f32.mrb[0].mxu0
  %v406 = vadd.f32 %v294, %v405
  %v407 = vpop.f32.mrb[0].mxu0
  %408 = vmatprep.mubr.bf16.mxu0 0
  %409 = vmatmul.mubr.bf16.gmra.mrb[0].mxu0 %v269
  %v410 = vpop.f32.mrb[0].mxu0
  %v411 = vadd.f32 %v294, %v410
  %v412 = vpop.f32.mrb[0].mxu0
  %v413 = vpop.f32.mrb[0].mxu0
  %v414 = vadd.f32 %v294, %v413
  %v415 = vpop.f32.mrb[0].mxu0
  %416 = vmatprep.mubr.bf16.mxu0 0
  %417 = vmatmul.mubr.bf16.gmra.mrb[0].mxu0 %v270
  %v418 = vpop.f32.mrb[0].mxu0
  %v419 = vadd.f32 %v294, %v418
  %v420 = vpop.f32.mrb[0].mxu0
  %v421 = vpop.f32.mrb[0].mxu0
  %v422 = vadd.f32 %v294, %v421
  %v423 = vpop.f32.mrb[0].mxu0
  %424 = vmatprep.mubr.bf16.mxu0 0
  %425 = vmatmul.mubr.bf16.gmra.mrb[0].mxu0 %v271
  %v426 = vpop.f32.mrb[0].mxu0
  %v427 = vadd.f32 %v294, %v426
  %v428 = vpop.f32.mrb[0].mxu0
  %v429 = vpop.f32.mrb[0].mxu0
  %v430 = vadd.f32 %v294, %v429
  %v431 = vpop.f32.mrb[0].mxu0
  %432 = vmatprep.mubr.bf16.mxu0 0
  %433 = vmatmul.mubr.bf16.gmra.mrb[0].mxu0 %v272
  %v434 = vpop.f32.mrb[0].mxu0
  %v435 = vadd.f32 %v294, %v434
  %v436 = vpop.f32.mrb[0].mxu0
  %v437 = vpop.f32.mrb[0].mxu0
  %v438 = vadd.f32 %v294, %v437
  %v439 = vpop.f32.mrb[0].mxu0
  %440 = vdwg.mxu0
  %v441 = vmax.f32 %v379, 0.0
  %v442 = vmax.f32 %v382, 0.0
  %v443 = vmax.f32 %v387, 0.0
  %v444 = vmax.f32 %v390, 0.0
  %v445 = vmax.f32 %v395, 0.0
  %v446 = vmax.f32 %v398, 0.0
  %v447 = vmax.f32 %v403, 0.0
  %v448 = vmax.f32 %v406, 0.0
  %v449 = vmax.f32 %v411, 0.0
  %v450 = vmax.f32 %v414, 0.0
  %v451 = vmax.f32 %v419, 0.0
  %v452 = vmax.f32 %v422, 0.0
  %v453 = vmax.f32 %v427, 0.0
  %v454 = vmax.f32 %v430, 0.0
  %v455 = vmax.f32 %v435, 0.0
  %v456 = vmax.f32 %v438, 0.0
  %v457 = vpack.c.bf16 %v442, %v441
  %v458 = vpack.c.bf16 %v444, %v443
  %v459 = vpack.c.bf16 %v446, %v445
  %v460 = vpack.c.bf16 %v448, %v447
  %v461 = vpack.c.bf16 %v450, %v449
  %v462 = vpack.c.bf16 %v452, %v451
  %v463 = vpack.c.bf16 %v454, %v453
  %v464 = vpack.c.bf16 %v456, %v455
  %v465 = vld [vmem:[%s6] sm:$0xf]
  %v466 = vld [vmem:[%s6 + $0x4] sm:$0xf]
  %v467 = vld [vmem:[%s6 + $0x8] sm:$0xf]
  %v468 = vld [vmem:[%s6 + $0xc] sm:$0xf]
  %v469 = vld [vmem:[%s6 + $0x10] sm:$0xf]
  %v470 = vld [vmem:[%s6 + $0x14] sm:$0xf]
  %v471 = vld [vmem:[%s6 + $0x18] sm:$0xf]
  %v472 = vld [vmem:[%s6 + $0x1c] sm:$0xf]
  %v473 = vld [vmem:[%s6 + $0x20] sm:$0xf]
  %v474 = vld [vmem:[%s6 + $0x24] sm:$0xf]
  %v475 = vld [vmem:[%s6 + $0x28] sm:$0xf]
  %v476 = vld [vmem:[%s6 + $0x2c] sm:$0xf]
  %v477 = vld [vmem:[%s6 + $0x30] sm:$0xf]
  %v478 = vld [vmem:[%s6 + $0x34] sm:$0xf]
  %v479 = vld [vmem:[%s6 + $0x38] sm:$0xf]
  %v480 = vld [vmem:[%s6 + $0x3c] sm:$0xf]
  %v481 = vld [vmem:[%s7] sm:$0x1]
  %v483 = vlaneseq
  %v484 = vshrl.u32 %v483, 7
  %v485 = vsub.s32 0, %v484
  %v486 = vrot.slane %v481, %v485
  %v504 = vunpack.c.l.b16 %v465
  %v505 = vunpack.c.l.b16 %v466
  %v506 = vunpack.c.l.b16 %v467
  %v507 = vunpack.c.l.b16 %v468
  %v508 = vunpack.c.l.b16 %v469
  %v509 = vunpack.c.l.b16 %v470
  %v510 = vunpack.c.l.b16 %v471
  %v511 = vunpack.c.l.b16 %v472
  %v512 = vunpack.c.l.b16 %v473
  %v513 = vunpack.c.l.b16 %v474
  %v514 = vunpack.c.l.b16 %v475
  %v515 = vunpack.c.l.b16 %v476
  %v516 = vunpack.c.l.b16 %v477
  %v517 = vunpack.c.l.b16 %v478
  %v518 = vunpack.c.l.b16 %v479
  %v519 = vunpack.c.l.b16 %v480
  %v520 = vpack.c.b16 %v505, %v504
  %v521 = vpack.c.b16 %v507, %v506
  %v522 = vpack.c.b16 %v509, %v508
  %v523 = vpack.c.b16 %v511, %v510
  %v524 = vpack.c.b16 %v513, %v512
  %v525 = vpack.c.b16 %v515, %v514
  %v526 = vpack.c.b16 %v517, %v516
  %v527 = vpack.c.b16 %v519, %v518
  %536 = vmatprep.subr.bf16.mxu0 0
  %537 = vmatpush1.bf16.msra.mxu0 %v520
  %538 = vmatprep.subr.bf16.mxu0 0
  %539 = vmatpush1.bf16.msra.mxu0 %v521
  %540 = vmatprep.subr.bf16.mxu0 0
  %541 = vmatpush1.bf16.msra.mxu0 %v522
  %542 = vmatprep.subr.bf16.mxu0 0
  %543 = vmatpush1.bf16.msra.mxu0 %v523
  %544 = vmatprep.subr.bf16.mxu0 0
  %545 = vmatpush1.bf16.msra.mxu0 %v524
  %546 = vmatprep.subr.bf16.mxu0 0
  %547 = vmatpush1.bf16.msra.mxu0 %v525
  %548 = vmatprep.subr.bf16.mxu0 0
  %549 = vmatpush1.bf16.msra.mxu0 %v526
  %550 = vmatprep.subr.bf16.mxu0 0
  %551 = vmatpush1.bf16.msra.mxu0 %v527
  %552 = vmatprep.subr.bf16.mxu0 0
  %553 = vmatpush1.bf16.msra.mxu0 0
  %554 = vmatprep.subr.bf16.mxu0 0
  %555 = vmatpush1.bf16.msra.mxu0 0
  %556 = vmatprep.subr.bf16.mxu0 0
  %557 = vmatpush1.bf16.msra.mxu0 0
  %558 = vmatprep.subr.bf16.mxu0 0
  %559 = vmatpush1.bf16.msra.mxu0 0
  %560 = vmatprep.subr.bf16.mxu0 0
  %561 = vmatpush1.bf16.msra.mxu0 0
  %562 = vmatprep.subr.bf16.mxu0 0
  %563 = vmatpush1.bf16.msra.mxu0 0
  %564 = vmatprep.subr.bf16.mxu0 0
  %565 = vmatpush1.bf16.msra.mxu0 0
  %566 = vmatprep.subr.bf16.mxu0 0
  %567 = vmatpush1.bf16.msra.mxu0 0
  %568 = vmatprep.mubr.bf16.mxu0 0
  %569 = vmatmul.mubr.bf16.gmra.mrb[0].mxu0 %v457
  %v570 = vpop.f32.mrb[0].mxu0
  %v571 = vadd.f32 %v486, %v570
  %v572 = vpop.f32.mrb[0].mxu0
  %v573 = vpop.f32.mrb[0].mxu0
  %v574 = vadd.f32 %v486, %v573
  %v575 = vpop.f32.mrb[0].mxu0
  %576 = vmatprep.mubr.bf16.mxu0 0
  %577 = vmatmul.mubr.bf16.gmra.mrb[0].mxu0 %v458
  %v578 = vpop.f32.mrb[0].mxu0
  %v579 = vadd.f32 %v486, %v578
  %v580 = vpop.f32.mrb[0].mxu0
  %v581 = vpop.f32.mrb[0].mxu0
  %v582 = vadd.f32 %v486, %v581
  %v583 = vpop.f32.mrb[0].mxu0
  %584 = vmatprep.mubr.bf16.mxu0 0
  %585 = vmatmul.mubr.bf16.gmra.mrb[0].mxu0 %v459
  %v586 = vpop.f32.mrb[0].mxu0
  %v587 = vadd.f32 %v486, %v586
  %v588 = vpop.f32.mrb[0].mxu0
  %v589 = vpop.f32.mrb[0].mxu0
  %v590 = vadd.f32 %v486, %v589
  %v591 = vpop.f32.mrb[0].mxu0
  %592 = vmatprep.mubr.bf16.mxu0 0
  %593 = vmatmul.mubr.bf16.gmra.mrb[0].mxu0 %v460
  %v594 = vpop.f32.mrb[0].mxu0
  %v595 = vadd.f32 %v486, %v594
  %v596 = vpop.f32.mrb[0].mxu0
  %v597 = vpop.f32.mrb[0].mxu0
  %v598 = vadd.f32 %v486, %v597
  %v599 = vpop.f32.mrb[0].mxu0
  %600 = vmatprep.mubr.bf16.mxu0 0
  %601 = vmatmul.mubr.bf16.gmra.mrb[0].mxu0 %v461
  %v602 = vpop.f32.mrb[0].mxu0
  %v603 = vadd.f32 %v486, %v602
  %v604 = vpop.f32.mrb[0].mxu0
  %v605 = vpop.f32.mrb[0].mxu0
  %v606 = vadd.f32 %v486, %v605
  %v607 = vpop.f32.mrb[0].mxu0
  %608 = vmatprep.mubr.bf16.mxu0 0
  %609 = vmatmul.mubr.bf16.gmra.mrb[0].mxu0 %v462
  %v610 = vpop.f32.mrb[0].mxu0
  %v611 = vadd.f32 %v486, %v610
  %v612 = vpop.f32.mrb[0].mxu0
  %v613 = vpop.f32.mrb[0].mxu0
  %v614 = vadd.f32 %v486, %v613
  %v615 = vpop.f32.mrb[0].mxu0
  %616 = vmatprep.mubr.bf16.mxu0 0
  %617 = vmatmul.mubr.bf16.gmra.mrb[0].mxu0 %v463
  %v618 = vpop.f32.mrb[0].mxu0
  %v619 = vadd.f32 %v486, %v618
  %v620 = vpop.f32.mrb[0].mxu0
  %v621 = vpop.f32.mrb[0].mxu0
  %v622 = vadd.f32 %v486, %v621
  %v623 = vpop.f32.mrb[0].mxu0
  %624 = vmatprep.mubr.bf16.mxu0 0
  %625 = vmatmul.mubr.bf16.gmra.mrb[0].mxu0 %v464
  %v626 = vpop.f32.mrb[0].mxu0
  %v627 = vadd.f32 %v486, %v626
  %v628 = vpop.f32.mrb[0].mxu0
  %v629 = vpop.f32.mrb[0].mxu0
  %v630 = vadd.f32 %v486, %v629
  %v631 = vpop.f32.mrb[0].mxu0
  %632 = vdwg.mxu0
  %v633 = vld [vmem:[%s70] sm:$0xff]
  %v634 = vld [vmem:[%s70 + $0x8] sm:$0xff]
  %v635 = vld [vmem:[%s70 + $0x10] sm:$0xff]
  %v636 = vld [vmem:[%s70 + $0x18] sm:$0xff]
  %v637 = vld [vmem:[%s70 + $0x20] sm:$0xff]
  %v638 = vld [vmem:[%s70 + $0x28] sm:$0xff]
  %v639 = vld [vmem:[%s70 + $0x30] sm:$0xff]
  %v640 = vld [vmem:[%s70 + $0x38] sm:$0xff]
  %v641 = vld [vmem:[%s70 + $0x40] sm:$0xff]
  %v642 = vld [vmem:[%s70 + $0x48] sm:$0xff]
  %v643 = vld [vmem:[%s70 + $0x50] sm:$0xff]
  %v644 = vld [vmem:[%s70 + $0x58] sm:$0xff]
  %v645 = vld [vmem:[%s70 + $0x60] sm:$0xff]
  %v646 = vld [vmem:[%s70 + $0x68] sm:$0xff]
  %v647 = vld [vmem:[%s70 + $0x70] sm:$0xff]
  %v648 = vld [vmem:[%s70 + $0x78] sm:$0xff]
  %v649 = vsub.f32 %v571, %v633
  %v650 = vsub.f32 %v574, %v634
  %v651 = vsub.f32 %v579, %v635
  %v652 = vsub.f32 %v582, %v636
  %v653 = vsub.f32 %v587, %v637
  %v654 = vsub.f32 %v590, %v638
  %v655 = vsub.f32 %v595, %v639
  %v656 = vsub.f32 %v598, %v640
  %v657 = vsub.f32 %v603, %v641
  %v658 = vsub.f32 %v606, %v642
  %v659 = vsub.f32 %v611, %v643
  %v660 = vsub.f32 %v614, %v644
  %v661 = vsub.f32 %v619, %v645
  %v662 = vsub.f32 %v622, %v646
  %v663 = vsub.f32 %v627, %v647
  %v664 = vsub.f32 %v630, %v648
  %v665 = vld [vmem:[%s8] sm:$0x1]
  %v666 = vmul.f32 %v649, %v649
  %v667 = vmul.f32 %v650, %v650
  %v668 = vmul.f32 %v651, %v651
  %v669 = vmul.f32 %v652, %v652
  %v670 = vmul.f32 %v653, %v653
  %v671 = vmul.f32 %v654, %v654
  %v672 = vmul.f32 %v655, %v655
  %v673 = vmul.f32 %v656, %v656
  %v674 = vmul.f32 %v657, %v657
  %v675 = vmul.f32 %v658, %v658
  %v676 = vmul.f32 %v659, %v659
  %v677 = vmul.f32 %v660, %v660
  %v678 = vmul.f32 %v661, %v661
  %v679 = vmul.f32 %v662, %v662
  %v680 = vmul.f32 %v663, %v663
  %v681 = vmul.f32 %v664, %v664
  %vm682 = vcmask 31744
  %v683 = vsel %vm682, %v666, 0.0
  %v684 = vsel %vm682, %v667, 0.0
  %v685 = vadd.f32 %v683, %v684
  %v686 = vsel %vm682, %v668, 0.0
  %v687 = vadd.f32 %v685, %v686
  %v688 = vsel %vm682, %v669, 0.0
  %v689 = vadd.f32 %v687, %v688
  %v690 = vsel %vm682, %v670, 0.0
  %v691 = vadd.f32 %v689, %v690
  %v692 = vsel %vm682, %v671, 0.0
  %v693 = vadd.f32 %v691, %v692
  %v694 = vsel %vm682, %v672, 0.0
  %v695 = vadd.f32 %v693, %v694
  %v696 = vsel %vm682, %v673, 0.0
  %v697 = vadd.f32 %v695, %v696
  %v698 = vsel %vm682, %v674, 0.0
  %v699 = vadd.f32 %v697, %v698
  %v700 = vsel %vm682, %v675, 0.0
  %v701 = vadd.f32 %v699, %v700
  %v702 = vsel %vm682, %v676, 0.0
  %v703 = vadd.f32 %v701, %v702
  %v704 = vsel %vm682, %v677, 0.0
  %v705 = vadd.f32 %v703, %v704
  %v706 = vsel %vm682, %v678, 0.0
  %v707 = vadd.f32 %v705, %v706
  %v708 = vsel %vm682, %v679, 0.0
  %v709 = vadd.f32 %v707, %v708
  %v710 = vsel %vm682, %v680, 0.0
  %v711 = vadd.f32 %v709, %v710
  %v712 = vsel %vm682, %v681, 0.0
  %v713 = vadd.f32 %v711, %v712
  %v714 = vrot.slane %v713, 4
  %v715 = vadd.f32 %v713, %v714
  %v716 = vrot.slane %v715, 2
  %v717 = vadd.f32 %v715, %v716
  %v718 = vrot.slane %v717, 1
  %v719 = vadd.f32 %v717, %v718
  %v720 = vadd.f32 %v665, %v719
  %vm721 = vcmask 24576
  %722 = vst.msk [vmem:[%s8] sm:$0x1] %vm721, %v720
  // Predicated region
  $region38: #{tpu_custom_call.1} parent=0 // pred_check
    %p723 = pneg %p74
  $region39: #{tpu_custom_call.1} parent=0 // pred_check_branch
    %725 = sbr.rel (%p723) target = $region41
  $region40: #{tpu_custom_call.1} parent=0 // pred_region
    %v726 = vld [vmem:[%s8] sm:$0xff]
    %v727 = vmul.f32 %v726, 0.0078125
    %728 = vst.msk [vmem:[%s8] sm:$0xff] %vm682, %v727
  $region41: #{tpu_custom_call.1} parent=0 // pred_fallthru
    _
  // Predicated region
  $region42: #{tpu_custom_call.1} parent=0 // pred_check
    _
  $region43: #{tpu_custom_call.1} parent=0 // pred_check_branch
    %730 = sbr.rel (0) target = $region45
  $region44: #{tpu_custom_call.1} parent=0 // pred_region
    _
  $region45: #{tpu_custom_call.1} parent=0 // pred_fallthru
    _
  // Predicated region
  $region46: #{tpu_custom_call.1} parent=0 // pred_check
    _
  $region47: #{tpu_custom_call.1} parent=0 // pred_check_branch
    %732 = sbr.rel (0) target = $region49
  $region48: #{tpu_custom_call.1} parent=0 // pred_region
    _
  $region49: #{tpu_custom_call.1} parent=0 // pred_fallthru
    _

</llo_original>
